<compile_context>
chip_gen: v5e
topology: v5e:2x2
jax: 0.10.0
libtpu: 0.0.40
codegen_flags: <defaults>
</compile_context>

<pallas_src>
import jax
import jax.numpy as jnp
from jax.experimental import pallas as pl
from jax.experimental.pallas import tpu as pltpu


def mlp_kernel(x_ref, w1_ref, b1_ref, w2_ref, b2_ref, out_ref):
    # ---- layer 1: MXU matmul with f32 accumulation, bias + ReLU on the VPU ----
    h = jnp.dot(x_ref[...], w1_ref[...], preferred_element_type=jnp.float32)   # (TB, H)
    h = jnp.maximum(h + b1_ref[...], 0.0)                                      # b1 broadcasts (1, H)

    # ---- layer 2 (H -> 1), computed transposed so the result is born lane-dense ----
    # (1, H) @ (H, TB) -> (1, TB); the in-kernel transpose rides the XLU slot (slack),
    # and the (1, TB) row avoids a 1-lane-wide output block and its masked partial stores.
    z = jnp.dot(w2_ref[...], h.T, preferred_element_type=jnp.float32)          # (1, TB)
    z = z + b2_ref[0, 0]                                                        # scalar bias from SMEM

    # sigmoid via EUP exp + approximate reciprocal (keeps the f32 divide off the VPU)
    out_ref[...] = pl.reciprocal(1.0 + jnp.exp(-z), approx=True).astype(out_ref.dtype)


def _round_up(v, m):
    return -(-v // m) * m


def neural_net_forward(x, w1, b1, w2, b2, *, batch_tile=4096):
    """Pallas forward: sigmoid(relu(x @ w1 + b1) @ w2 + b2).

    x:  (B, D_in)   float32
    w1: (D_in, H)   float32   (PyTorch linear1.weight.T)
    b1: (H,) or (1, H)        float32
    w2: (H, 1) or (H,)        float32   (PyTorch linear2.weight.T)
    b2: scalar / (1,) / (1,1) float32
    returns (B, 1)  float32
    """
    B, D_in = x.shape
    H = w1.shape[1]

    b1_row = jnp.asarray(b1, jnp.float32).reshape(1, H)
    w2_row = jnp.asarray(w2, jnp.float32).reshape(1, H)   # (H,1) -> (1,H), element order preserved
    b2_s = jnp.asarray(b2, jnp.float32).reshape(1, 1)     # true scalar, rides the SMEM path

    # Advisory cost so XLA can overlap this small custom call with surrounding ops.
    flops = 2 * B * D_in * H + 2 * B * H
    bytes_accessed = 4 * (x.size + w1.size + b1_row.size + w2_row.size + b2_s.size + B)
    cost = pl.CostEstimate(flops=flops, transcendentals=B, bytes_accessed=bytes_accessed)

    if B <= batch_tile:
        # Small problem: everything is one block in VMEM, no grid / pipelining overhead.
        out = pl.pallas_call(
            mlp_kernel,
            out_shape=jax.ShapeDtypeStruct((1, B), jnp.float32),
            in_specs=[
                pl.BlockSpec(memory_space=pltpu.MemorySpace.VMEM),   # x
                pl.BlockSpec(memory_space=pltpu.MemorySpace.VMEM),   # w1
                pl.BlockSpec(memory_space=pltpu.MemorySpace.VMEM),   # b1
                pl.BlockSpec(memory_space=pltpu.MemorySpace.VMEM),   # w2 (1, H)
                pl.BlockSpec(memory_space=pltpu.MemorySpace.SMEM),   # b2 scalar
            ],
            out_specs=pl.BlockSpec(memory_space=pltpu.MemorySpace.VMEM),
            cost_estimate=cost,
        )(x, w1, b1_row, w2_row, b2_s)
        return out.reshape(B, 1)   # (1, B) and (B, 1) share the same row-major memory: free

    # Large batch: batch-tiled grid, NO host-side padding — Pallas masks the ragged last block.
    # TB must be a multiple of 128 (lane dim of the (1, TB) output block; also covers the
    # 8-sublane rule for the (TB, D_in) input block).
    TB = min(_round_up(batch_tile, 128), _round_up(B, 128))
    steps = pl.cdiv(B, TB)
    if steps > 1 and steps % 2 == 1:
        # v7x has 2 TensorCores: an even step count lets "parallel" balance both.
        TB = _round_up(pl.cdiv(B, steps + 1), 128)
        steps = pl.cdiv(B, TB)

    out = pl.pallas_call(
        mlp_kernel,
        out_shape=jax.ShapeDtypeStruct((1, B), jnp.float32),
        grid=(steps,),
        in_specs=[
            pl.BlockSpec((TB, D_in), lambda i: (i, 0)),              # x: batch-tiled, double-buffered
            pl.BlockSpec((D_in, H), lambda i: (0, 0)),               # w1: pinned across the grid
            pl.BlockSpec((1, H), lambda i: (0, 0)),                  # b1: pinned
            pl.BlockSpec((1, H), lambda i: (0, 0)),                  # w2: pinned
            pl.BlockSpec(memory_space=pltpu.MemorySpace.SMEM),       # b2 scalar
        ],
        out_specs=pl.BlockSpec((1, TB), lambda i: (0, i)),           # lane-dense output row
        compiler_params=pltpu.CompilerParams(
            dimension_semantics=("parallel",),
        ),
        cost_estimate=cost,
    )(x, w1, b1_row, w2_row, b2_s)
    return out.reshape(B, 1)


def _ref_forward(x, w1, b1, w2, b2):
    return jax.nn.sigmoid(
        jnp.maximum(x @ w1 + b1.reshape(1, -1), 0.0) @ w2.reshape(-1, 1) + b2.reshape(1, 1)
    )


if __name__ == "__main__":
    # Shapes consistent with NeuralNet(input_size, hidden_size)
    batch, input_size, hidden_size = 8, 16, 32

    key = jax.random.PRNGKey(0)
    k_x, k_w1, k_b1, k_w2, k_b2, k_xl = jax.random.split(key, 6)

    # Deterministic parameter init (PyTorch-style uniform fan-in bound).
    bound1 = 1.0 / (input_size ** 0.5)
    bound2 = 1.0 / (hidden_size ** 0.5)
    x = jax.random.normal(k_x, (batch, input_size), dtype=jnp.float32)
    w1 = jax.random.uniform(k_w1, (input_size, hidden_size), jnp.float32, -bound1, bound1)
    b1 = jax.random.uniform(k_b1, (1, hidden_size), jnp.float32, -bound1, bound1)
    w2 = jax.random.uniform(k_w2, (hidden_size, 1), jnp.float32, -bound2, bound2)
    b2 = jax.random.uniform(k_b2, (1, 1), jnp.float32, -bound2, bound2)

    # Tolerance note: approx=True reciprocal has ~2^-12 relative error, so sigmoid outputs in
    # (0, 1) match the exact reference to well under 1e-3.
    ATOL = 2e-3

    # --- small-batch path (single block, no grid) ---
    out = neural_net_forward(x, w1, b1, w2, b2)
    jax.block_until_ready(out)
    ref = _ref_forward(x, w1, b1, w2, b2)
    assert out.shape == (batch, 1)
    assert jnp.allclose(out, ref, atol=ATOL, rtol=ATOL)

    # --- batch-tiled grid path: ragged last block (no host padding) + even-step adjustment ---
    big_batch = 5000  # not a multiple of any tile -> exercises masked partial blocks
    x_big = jax.random.normal(k_xl, (big_batch, input_size), dtype=jnp.float32)
    ref_big = _ref_forward(x_big, w1, b1, w2, b2)

    out_big = neural_net_forward(x_big, w1, b1, w2, b2, batch_tile=1024)  # 5 steps -> even 6
    jax.block_until_ready(out_big)
    assert out_big.shape == (big_batch, 1)
    assert jnp.allclose(out_big, ref_big, atol=ATOL, rtol=ATOL)

    # --- default tile (4096): 2 grid steps with a ragged tail ---
    out_big2 = neural_net_forward(x_big, w1, b1, w2, b2)
    jax.block_until_ready(out_big2)
    assert out_big2.shape == (big_batch, 1)
    assert jnp.allclose(out_big2, ref_big, atol=ATOL, rtol=ATOL)

    print("KERNEL_OK")
</pallas_src>

<mosaic_0001>
module attributes {stable_mosaic.version = 11 : i64} {
  func.func @mlp_kernel(%arg0: memref<8x16xf32, #tpu.memory_space<vmem>>, %arg1: memref<16x32xf32, #tpu.memory_space<vmem>>, %arg2: memref<1x32xf32, #tpu.memory_space<vmem>>, %arg3: memref<1x32xf32, #tpu.memory_space<vmem>>, %arg4: memref<1x1xf32, #tpu.memory_space<smem>>, %arg5: memref<1x8xf32, #tpu.memory_space<vmem>>) attributes {dimension_semantics = [], scalar_prefetch = 0 : i64, scratch_operands = 0 : i64, tpu.core_type = #tpu.core_type<tc>} {
    %c0 = arith.constant 0 : index
    %c0_0 = arith.constant 0 : index
    %0 = vector.load %arg0[%c0, %c0_0] : memref<8x16xf32, #tpu.memory_space<vmem>>, vector<8x16xf32>
    %c0_1 = arith.constant 0 : index
    %c0_2 = arith.constant 0 : index
    %1 = vector.load %arg1[%c0_1, %c0_2] : memref<16x32xf32, #tpu.memory_space<vmem>>, vector<16x32xf32>
    %cst = arith.constant dense<0.000000e+00> : vector<8x32xf32>
    %2 = tpu.matmul %0, %1, %cst {dimension_numbers = #tpu.dot_dimension_numbers<[1], [0], [0], [1], [0, 0, 1, 1], [], []>} : vector<8x16xf32>, vector<16x32xf32>, vector<8x32xf32> -> vector<8x32xf32>
    %c0_3 = arith.constant 0 : index
    %c0_4 = arith.constant 0 : index
    %3 = vector.load %arg2[%c0_3, %c0_4] : memref<1x32xf32, #tpu.memory_space<vmem>>, vector<1x32xf32>
    %4 = vector.broadcast %3 : vector<1x32xf32> to vector<8x32xf32>
    %5 = arith.addf %2, %4 : vector<8x32xf32>
    %cst_5 = arith.constant 0.000000e+00 : f32
    %6 = vector.broadcast %cst_5 : f32 to vector<8x32xf32>
    %7 = arith.maximumf %5, %6 : vector<8x32xf32>
    %c0_6 = arith.constant 0 : index
    %c0_7 = arith.constant 0 : index
    %8 = vector.load %arg3[%c0_6, %c0_7] : memref<1x32xf32, #tpu.memory_space<vmem>>, vector<1x32xf32>
    %9 = tpu.transpose %7, [1, 0] : vector<8x32xf32> -> vector<32x8xf32>
    %cst_8 = arith.constant dense<0.000000e+00> : vector<1x8xf32>
    %10 = tpu.matmul %8, %9, %cst_8 {dimension_numbers = #tpu.dot_dimension_numbers<[1], [0], [0], [1], [0, 0, 1, 1], [], []>} : vector<1x32xf32>, vector<32x8xf32>, vector<1x8xf32> -> vector<1x8xf32>
    %c0_9 = arith.constant 0 : index
    %c0_10 = arith.constant 0 : index
    %11 = memref.load %arg4[%c0_9, %c0_10] : memref<1x1xf32, #tpu.memory_space<smem>>
    %12 = vector.broadcast %11 : f32 to vector<1x8xf32>
    %13 = arith.addf %10, %12 : vector<1x8xf32>
    %cst_11 = arith.constant 0.000000e+00 : f32
    %14 = vector.broadcast %cst_11 : f32 to vector<1x8xf32>
    %15 = arith.subf %14, %13 : vector<1x8xf32>
    %16 = math.exp %15 : vector<1x8xf32>
    %cst_12 = arith.constant 1.000000e+00 : f32
    %17 = vector.broadcast %cst_12 : f32 to vector<1x8xf32>
    %18 = arith.addf %17, %16 : vector<1x8xf32>
    %19 = tpu.reciprocal %18 {approx = true} : vector<1x8xf32> -> vector<1x8xf32>
    %c0_13 = arith.constant 0 : index
    %c0_14 = arith.constant 0 : index
    %20 = vector.load %arg5[%c0_13, %c0_14] : memref<1x8xf32, #tpu.memory_space<vmem>>, vector<1x8xf32>
    tpu.vector_store %arg5[%c0_13, %c0_14], %19 {strides = array<i32>} : memref<1x8xf32, #tpu.memory_space<vmem>>, vector<1x8xf32>,
    return
  }
}

</mosaic_0001>

<llo_original>
// kernel: tpu_custom_call.1
$region0: #{tpu_custom_call.1}
  #allocation0 [shape = 'u32[]', space=smem, size = 0x4, offset = 0x4, fixed_abs, tag = 'smem constant byte address 0x4 - core index']
  #allocation1 [shape = 'u32[72,128]{1,0:T(1,128)}', space=vmem, size = 0x9000, scoped, tag = 'internal scratch']
  #allocation2 [shape = 'f32[1,1]{1,0:T(1,128)S(6)}', space=smem, size = 0x200, scoped, tag = 'scoped memory for tpu_custom_call.1']
  %s0 = inlined_call_operand.hbm [shape: f32[8,16], index: 0, kind: input, shape index: {}]
  %s1 = inlined_call_operand.hbm [shape: f32[16,32], index: 1, kind: input, shape index: {}]
  %s2 = inlined_call_operand.vmem [shape: f32[1,32], index: 2, kind: input, shape index: {}]
  %s3 = inlined_call_operand.vmem [shape: f32[1,32], index: 3, kind: input, shape index: {}]
  %s4 = inlined_call_operand.<no memory space> [shape: f32[1,1], index: 4, kind: input, shape index: {}]
  %s5 = inlined_call_operand.hbm [shape: f32[1,8], index: 5, kind: output, shape index: {}]
  %s6 = sld [smem:[#allocation0]]
  $region38: #{tpu_custom_call.1} parent=0
    _
  %s8 = ssub.s32 1, %s6
  %s9 = scalar_select 0, %s8, %s6
  %10 = sst [smem:[#allocation2]] %s4
  $region1: #{tpu_custom_call.1} parent=0
    #allocation3 [shape = 'u8[4096]{0}', space=vmem, size = 0x1000, scoped, tag = 'input window, operand 0, single buffered']
    #allocation4 [shape = 's32[1]{0}', space=sflag, size = 0x4, scoped, tag = 'scoped memory for tpu_custom_call.1']
    #allocation5 [shape = 's32[1]{0}', space=sflag, size = 0x4, scoped, tag = 'scoped memory for tpu_custom_call.1']
    #allocation6 [shape = 'u8[8192]{0}', space=vmem, size = 0x2000, scoped, tag = 'input window, operand 1, single buffered']
    #allocation7 [shape = 's32[1]{0}', space=sflag, size = 0x4, scoped, tag = 'scoped memory for tpu_custom_call.1']
    #allocation8 [shape = 'u8[512]{0}', space=vmem, size = 0x400, scoped, tag = 'output window, operand 0, single buffered']
    %11 = vsyncpa [#allocation4], 0
    %12 = vsyncpa [#allocation7], 0
    %13 = vsyncpa [#allocation5], 0
    // Predicated region
    $region2: #{tpu_custom_call.1} parent=1 // pred_check
      _
    $region3: #{tpu_custom_call.1} parent=1 // pred_check_branch
      %15 = sbr.rel (0) target = $region5
    $region4: #{tpu_custom_call.1} parent=1 // pred_region
      %17 = vsyncadd [#allocation4], 0
      %s19 = sshll.u32 %s0, 4
      %s20 = int_to_ptr.hbm [resolvable:$true] %s19
      %s21 = sshll.u32 [#allocation3], 4
      %s22 = int_to_ptr.vmem [resolvable:$true] %s21
      %24 = dma.hbm_to_vmem [thread:$0]  %s20, 128, %s22, [#allocation4]
    $region5: #{tpu_custom_call.1} parent=1 // pred_fallthru
      _
    // Predicated region
    $region6: #{tpu_custom_call.1} parent=1 // pred_check
      _
    $region7: #{tpu_custom_call.1} parent=1 // pred_check_branch
      %26 = sbr.rel (0) target = $region9
    $region8: #{tpu_custom_call.1} parent=1 // pred_region
      %28 = vsyncadd [#allocation7], 0
      %s29 = sshll.u32 %s1, 4
      %s30 = int_to_ptr.hbm [resolvable:$true] %s29
      %s31 = sshll.u32 [#allocation6], 4
      %s32 = int_to_ptr.vmem [resolvable:$true] %s31
      %37 = dma.hbm_to_vmem [thread:$0]  %s30, 256, %s32, [#allocation7], 128, 128, 8
    $region9: #{tpu_custom_call.1} parent=1 // pred_fallthru
      _
    // Predicated region
    $region10: #{tpu_custom_call.1} parent=1 // pred_check
      _
    $region11: #{tpu_custom_call.1} parent=1 // pred_check_branch
      %39 = sbr.rel (0) target = $region13
    $region12: #{tpu_custom_call.1} parent=1 // pred_region
      _
    $region13: #{tpu_custom_call.1} parent=1 // pred_fallthru
      _
    // Predicated region
    $region14: #{tpu_custom_call.1} parent=1 // pred_check
      _
    $region15: #{tpu_custom_call.1} parent=1 // pred_check_branch
      %41 = sbr.rel (0) target = $region17
    $region16: #{tpu_custom_call.1} parent=1 // pred_region
      _
    $region17: #{tpu_custom_call.1} parent=1 // pred_fallthru
      _
    // Predicated region
    $region18: #{tpu_custom_call.1} parent=1 // pred_check
      _
    $region19: #{tpu_custom_call.1} parent=1 // pred_check_branch
      %43 = sbr.rel (0) target = $region21
    $region20: #{tpu_custom_call.1} parent=1 // pred_region
      _
    $region21: #{tpu_custom_call.1} parent=1 // pred_fallthru
      _
    // Predicated region
    $region22: #{tpu_custom_call.1} parent=1 // pred_check
      _
    $region23: #{tpu_custom_call.1} parent=1 // pred_check_branch
      %45 = sbr.rel (0) target = $region25
    $region24: #{tpu_custom_call.1} parent=1 // pred_region
      %47 = dma.done [#allocation4], 128
    $region25: #{tpu_custom_call.1} parent=1 // pred_fallthru
      _
    // Predicated region
    $region26: #{tpu_custom_call.1} parent=1 // pred_check
      _
    $region27: #{tpu_custom_call.1} parent=1 // pred_check_branch
      %49 = sbr.rel (0) target = $region29
    $region28: #{tpu_custom_call.1} parent=1 // pred_region
      %51 = dma.done [#allocation7], 256
    $region29: #{tpu_custom_call.1} parent=1 // pred_fallthru
      _
    %v52 = vld [vmem:[#allocation3] sm:$0xff]
    %v53 = vld [vmem:[#allocation6] sm:$0xff]
    %v54 = vld [vmem:[#allocation6 + $0x8] sm:$0xff]
    %v55 = vld [vmem:[%s2] sm:$0x1]
    %v57 = vperm.slane %v55, 0
    %vm59 = vcmask 130048
    %v61 = vsel %vm59, %v52, 0
    %63 = vmatpush.msra.mxu0 0.0
    %64 = vmatpush.msra.mxu0 0.0
    %65 = vmatpush.msra.mxu0 0.0
    %66 = vmatpush.msra.mxu0 0.0
    %67 = vmatpush.msra.mxu0 0.0
    %68 = vmatpush.msra.mxu0 0.0
    %69 = vmatpush.msra.mxu0 0.0
    %70 = vmatpush.msra.mxu0 0.0
    %71 = vmatpush.msra.mxu0 0.0
    %72 = vmatpush.msra.mxu0 0.0
    %73 = vmatpush.msra.mxu0 0.0
    %74 = vmatpush.msra.mxu0 0.0
    %75 = vmatpush.msra.mxu0 0.0
    %76 = vmatpush.msra.mxu0 0.0
    %77 = vmatpush.msra.mxu0 %v54
    %78 = vmatpush.msra.mxu0 %v53
    %79 = vmatmul.f32.gmra.mxu0 %v61
    %v80 = vpop.f32.mrf.mxu0
    %v81 = vadd.f32 %v57, %v80
    %82 = vdwg.mxu0
    %v83 = vmax.f32 %v81, 0.0
    %v84 = vld [vmem:[%s3] sm:$0x1]
    %s85 = sld [smem:[#allocation2]]
    %v86 = vstv %s85
    %vm87 = vcmask 261120
    %v89 = vsel %vm87, %v84, 0
    %v92 = vsel %vm87, %v83, 0
    %94 = vmatpush.xpose.msra.mxu0 0.0
    %95 = vmatpush.xpose.msra.mxu0 0.0
    %96 = vmatpush.xpose.msra.mxu0 0.0
    %97 = vmatpush.xpose.msra.mxu0 0.0
    %98 = vmatpush.xpose.msra.mxu0 0.0
    %99 = vmatpush.xpose.msra.mxu0 0.0
    %100 = vmatpush.xpose.msra.mxu0 0.0
    %101 = vmatpush.xpose.msra.mxu0 0.0
    %102 = vmatpush.xpose.msra.mxu0 0.0
    %103 = vmatpush.xpose.msra.mxu0 0.0
    %104 = vmatpush.xpose.msra.mxu0 0.0
    %105 = vmatpush.xpose.msra.mxu0 0.0
    %106 = vmatpush.xpose.msra.mxu0 0.0
    %107 = vmatpush.xpose.msra.mxu0 0.0
    %108 = vmatpush.xpose.msra.mxu0 0.0
    %109 = vmatpush.xpose.msra.mxu0 %v92
    %110 = vmatmul.f32.gmra.mxu0 %v89
    %v111 = vpop.f32.mrf.mxu0
    %v112 = vadd.f32 %v86, %v111
    %113 = vdwg.mxu0
    %v114 = vsub.f32 0.0, %v112
    %v115 = vmul.f32 %v114, 1.442695
    %v116 = vpow.pop %v115
    %v117 = vadd.f32 %v116, 1.0
    %v118 = vrcp.pop %v117
    %vm119 = vcmask 57344
    %120 = vst.msk [vmem:[#allocation8] sm:$0x1] %vm119, %v118
    // Predicated region
    $region30: #{tpu_custom_call.1} parent=1 // pred_check
      _
    $region31: #{tpu_custom_call.1} parent=1 // pred_check_branch
      %122 = sbr.rel (0) target = $region33
    $region32: #{tpu_custom_call.1} parent=1 // pred_region
      %124 = vsyncadd [#allocation5], 0
      %s126 = sshll.u32 [#allocation8], 4
      %s127 = int_to_ptr.vmem [resolvable:$true] %s126
      %s128 = sshll.u32 %s5, 4
      %s129 = int_to_ptr.hbm [resolvable:$true] %s128
      %131 = dma.vmem_to_hbm [thread:$0]  %s127, 16, %s129, [#allocation5]
    $region33: #{tpu_custom_call.1} parent=1 // pred_fallthru
      _
    // Predicated region
    $region34: #{tpu_custom_call.1} parent=1 // pred_check
      _
    $region35: #{tpu_custom_call.1} parent=1 // pred_check_branch
      %133 = sbr.rel (0) target = $region37
    $region36: #{tpu_custom_call.1} parent=1 // pred_region
      %135 = dma.done [#allocation5], 16
    $region37: #{tpu_custom_call.1} parent=1 // pred_fallthru
      _
    %136 = vsyncpa [#allocation4], 1
    %137 = vsyncpa [#allocation7], 1
    %138 = vsyncpa [#allocation5], 1

</llo_original>
